<compile_context>
chip_gen: v6e
topology: v6e:2x2x1
jax: 0.10.0
libtpu: 0.0.40
codegen_flags: <defaults>
</compile_context>

<pallas_src>
import functools

import jax
import jax.numpy as jnp
from jax.experimental import pallas as pl
from jax.experimental.pallas import tpu as pltpu


_LANE = 128
_DEFAULT_TILE_M = 8192   # anchors per grid step (8-16k per review; ~27 MiB VMEM @ f32)


def _ssd_loss_kernel(tb_ref, pb_ref, tcr_ref, tcc_ref, logits_ref,
                     neg_ce_ref, part_ref, *, bn):
    """Fused per-anchor losses + per-tile partial reductions for one tile.

    tb_ref:     (4, TM)   target boxes, anchors on the lane axis
    pb_ref:     (4, TM)   predicted boxes, anchors on the lane axis
    tcr_ref:    (1, TM)   int32 target classes (lane-major copy)
    tcc_ref:    (TM, 1)   int32 target classes (column copy, for the CE gather)
    logits_ref: (TM, C)   predicted class logits (native layout / dtype)
    neg_ce_ref: (TM, 1)   f32 out: per-anchor cross entropy, -inf on positives
    part_ref:   (1, 8, 128) f32 out: lane0=sum pos smooth-L1, lane1=sum pos CE,
                                     lane2=positive count (tile partials)
    """
    i = pl.program_id(0)
    tm = tcr_ref.shape[1]

    # ---------------- lane-major branch (anchors on the 128-lane axis) -------
    tc_r = tcr_ref[...]                                        # (1, TM) int32
    lane = jax.lax.broadcasted_iota(jnp.int32, (1, tm), 1)
    valid_r = (i * tm + lane) < bn                             # mask tail rows
    pos_r = (tc_r > 0) & valid_r

    d = pb_ref[...].astype(jnp.float32) - tb_ref[...].astype(jnp.float32)
    ad = jnp.abs(d)
    sl1 = jnp.where(ad < 1.0, 0.5 * d * d, ad - 0.5)           # (4, TM)
    loc = jnp.sum(sl1, axis=0, keepdims=True)                  # (1, TM)
    loc_sum = jnp.sum(jnp.where(pos_r, loc, 0.0))              # scalar (select kills NaN tails)
    pos_cnt = jnp.sum(jnp.where(pos_r, 1.0, 0.0))              # scalar

    # ---------------- column branch: cross entropy over C classes ------------
    tc_c = tcc_ref[...]                                        # (TM, 1) int32
    sub = jax.lax.broadcasted_iota(jnp.int32, (tm, 1), 0)
    valid_c = (i * tm + sub) < bn                              # (TM, 1)
    pos_c = (tc_c > 0) & valid_c

    # Sanitize the (possibly stale-VMEM) tail rows so exp/log never emit NaN/Inf
    # into the tile partial sums.
    logits = jnp.where(valid_c, logits_ref[...].astype(jnp.float32), 0.0)
    m = jnp.max(logits, axis=-1, keepdims=True)
    e = jnp.exp(logits - m)
    lse = m + jnp.log(jnp.sum(e, axis=-1, keepdims=True))
    cls_iota = jax.lax.broadcasted_iota(jnp.int32, logits.shape, 1)
    # TODO(synk): out-of-range class ids fall back to ce=lse (reference clamps).
    tgt = jnp.sum(jnp.where(cls_iota == tc_c, logits, 0.0),
                  axis=-1, keepdims=True)
    ce = lse - tgt                                             # (TM, 1)

    pos_ce_sum = jnp.sum(jnp.where(pos_c, ce, 0.0))            # scalar

    # Negatives-only CE (positives -> -inf) so the glue can mine directly.
    neg_ce_ref[...] = jnp.where(pos_c, -jnp.inf, ce)

    lane3 = jax.lax.broadcasted_iota(jnp.int32, (1, 8, _LANE), 2)
    part_ref[...] = jnp.where(
        lane3 == 0, loc_sum,
        jnp.where(lane3 == 1, pos_ce_sum,
                  jnp.where(lane3 == 2, pos_cnt, 0.0)))


def _per_anchor_losses(tb_t, pb_t, tc_row, tc_col, logits, *, bn, tile_m):
    """Run the fused kernel; returns (neg_masked_ce (BN,1), partials (G,8,128))."""
    c = logits.shape[-1]
    tm = tile_m if bn > tile_m else bn        # small inputs: one full-array block
    grid_n = pl.cdiv(bn, tm)                  # boundary block handles the tail

    kernel = functools.partial(_ssd_loss_kernel, bn=bn)
    neg_ce, partials = pl.pallas_call(
        kernel,
        out_shape=(
            jax.ShapeDtypeStruct((bn, 1), jnp.float32),
            jax.ShapeDtypeStruct((grid_n, 8, _LANE), jnp.float32),
        ),
        grid_spec=pltpu.PrefetchScalarGridSpec(
            num_scalar_prefetch=0,
            grid=(grid_n,),
            in_specs=[
                pl.BlockSpec((4, tm), lambda i: (0, i)),          # target boxes
                pl.BlockSpec((4, tm), lambda i: (0, i)),          # predicted boxes
                pl.BlockSpec((1, tm), lambda i: (0, i)),          # classes (lane-major)
                pl.BlockSpec((tm, 1), lambda i: (i, 0)),          # classes (column)
                pl.BlockSpec((tm, c), lambda i: (i, 0)),          # logits (native)
            ],
            out_specs=[
                pl.BlockSpec((tm, 1), lambda i: (i, 0)),          # neg-masked CE
                pl.BlockSpec((1, 8, _LANE), lambda i: (i, 0, 0)),  # tile partials
            ],
        ),
        compiler_params=pltpu.CompilerParams(
            dimension_semantics=("parallel",),      # megacore sharding on v7x
            vmem_limit_bytes=48 * 1024 * 1024,      # explicit scoped-VMEM budget
        ),
    )(tb_t, pb_t, tc_row, tc_col, logits)
    return neg_ce, partials


def _sum_top_k_desc(x, k, iters=40):
    """Sum of the k largest finite entries of x (f32; -inf marks excluded entries).

    k is a dynamic, integer-valued f32 scalar with 0 <= k <= #finite entries.
    Fixed-iteration threshold bisection instead of a full XLA sort.
    """
    finite = x > -jnp.inf
    any_fin = jnp.any(finite)
    lo0 = jnp.where(any_fin, jnp.min(jnp.where(finite, x, jnp.inf)), 0.0) - 1.0
    hi0 = jnp.where(any_fin, jnp.max(jnp.where(finite, x, -jnp.inf)), 0.0)

    def body(_, lohi):
        lo, hi = lohi
        mid = 0.5 * (lo + hi)
        cnt = jnp.sum(jnp.where(x >= mid, 1.0, 0.0))
        take = cnt >= k                      # invariant: count(x >= lo) >= k
        return jnp.where(take, mid, lo), jnp.where(take, hi, mid)

    lo, _ = jax.lax.fori_loop(0, iters, body, (lo0, hi0))
    above = x > lo
    cnt_above = jnp.sum(jnp.where(above, 1.0, 0.0))
    sum_above = jnp.sum(jnp.where(above, x, 0.0))
    res = sum_above + (k - cnt_above) * lo
    return jnp.where(k > 0.0, res, 0.0)


@functools.partial(jax.jit, static_argnames=("alpha", "tile_m"))
def ssd_loss(target_bounding_boxes, target_classes,
             predicted_bounding_boxes, predicted_class_logits,
             alpha=1.0, tile_m=_DEFAULT_TILE_M):
    b, n, _ = target_bounding_boxes.shape
    c = predicted_class_logits.shape[-1]
    bn = b * n

    # Anchors go on the 128-lane axis for the narrow per-anchor arrays; these
    # transposes are a few MB of plumbing (the large logits array is NOT copied).
    tb_t = jnp.transpose(target_bounding_boxes.reshape(bn, 4))      # (4, BN)
    pb_t = jnp.transpose(predicted_bounding_boxes.reshape(bn, 4))   # (4, BN)
    tc_i = target_classes.astype(jnp.int32)
    tc_row = tc_i.reshape(1, bn)                                    # (1, BN)
    tc_col = tc_i.reshape(bn, 1)                                    # (BN, 1)
    logits = predicted_class_logits.reshape(bn, c)                  # native dtype

    neg_ce, partials = _per_anchor_losses(
        tb_t, pb_t, tc_row, tc_col, logits, bn=bn, tile_m=tile_m)

    # Tiny glue over per-tile partials (no extra BN-length passes needed).
    loc_sum = jnp.sum(partials[:, 0, 0])
    pos_ce_sum = jnp.sum(partials[:, 0, 1])
    raw_pos = jnp.sum(partials[:, 0, 2])

    num_pos = jnp.maximum(raw_pos, 1.0)                             # clamp(min=1)
    num_neg = jnp.minimum(3.0 * num_pos, jnp.float32(bn) - raw_pos)  # clamp(max=#neg)

    location_loss = loc_sum / num_pos

    # TODO(synk): k (num_neg) is data-dependent; mining stays in JAX glue, but as
    # a fixed-iteration threshold bisection instead of a full sort.
    topk_neg_sum = _sum_top_k_desc(neg_ce[:, 0], num_neg)
    mined_loss = (topk_neg_sum + pos_ce_sum) / (num_neg + num_pos)

    total_loss = location_loss + alpha * mined_loss
    return total_loss, location_loss, mined_loss


def _reference(tb, tc, pb, lg, alpha=1.0):
    """Pure-JAX reference mirroring the PyTorch forward (sort-based mining)."""
    b, n, _ = tb.shape
    c = lg.shape[-1]
    is_pos = tc > 0
    raw_pos = jnp.sum(is_pos)
    num_pos = jnp.maximum(raw_pos, 1).astype(jnp.float32)
    d = pb.astype(jnp.float32) - tb.astype(jnp.float32)
    ad = jnp.abs(d)
    sl1 = jnp.where(ad < 1.0, 0.5 * d * d, ad - 0.5)
    loc = jnp.sum(jnp.where(is_pos[..., None], sl1, 0.0)) / num_pos
    logits = lg.reshape(b * n, c).astype(jnp.float32)
    targets = tc.reshape(b * n)
    ce = jax.nn.logsumexp(logits, axis=-1) - jnp.take_along_axis(
        logits, targets[:, None], axis=-1)[:, 0]
    posm = is_pos.reshape(b * n)
    num_neg = jnp.minimum(3.0 * num_pos, jnp.float32(b * n) - raw_pos)
    sorted_neg = jnp.sort(jnp.where(posm, -jnp.inf, ce))[::-1]
    topk = jnp.sum(jnp.where(jnp.arange(b * n) < num_neg, sorted_neg, 0.0))
    mined = (topk + jnp.sum(jnp.where(posm, ce, 0.0))) / (num_neg + num_pos)
    return loc + alpha * mined, loc, mined


if __name__ == "__main__":
    key = jax.random.PRNGKey(0)
    k1, k2, k3, k4, k5, k6, k7, k8 = jax.random.split(key, 8)

    # --- small test (single full-array block path) ---
    batch, num_boxes, num_classes_plus_bg = 2, 8, 8   # classes 1..7, 0 = background
    target_bounding_boxes = jax.random.uniform(k1, (batch, num_boxes, 4),
                                               dtype=jnp.float32)
    target_classes = jax.random.randint(k2, (batch, num_boxes), 0,
                                        num_classes_plus_bg, dtype=jnp.int32)
    predicted_bounding_boxes = jax.random.normal(k3, (batch, num_boxes, 4),
                                                 dtype=jnp.float32)
    predicted_class_logits = jax.random.normal(
        k4, (batch, num_boxes, num_classes_plus_bg), dtype=jnp.float32)

    total, loc, mined = ssd_loss(target_bounding_boxes, target_classes,
                                 predicted_bounding_boxes,
                                 predicted_class_logits, alpha=1.0)
    jax.block_until_ready((total, loc, mined))

    ref_total, ref_loc, ref_mined = _reference(
        target_bounding_boxes, target_classes,
        predicted_bounding_boxes, predicted_class_logits, alpha=1.0)
    assert jnp.allclose(total, ref_total, rtol=1e-4, atol=1e-5), (total, ref_total)
    assert jnp.allclose(loc, ref_loc, rtol=1e-4, atol=1e-5), (loc, ref_loc)
    assert jnp.allclose(mined, ref_mined, rtol=1e-4, atol=1e-5), (mined, ref_mined)

    # --- larger test (single-block path at the default tile size) ---
    b2, n2, c2 = 2, 1100, 21
    tb2 = jax.random.uniform(k5, (b2, n2, 4), dtype=jnp.float32)
    tc2 = jax.random.randint(k6, (b2, n2), 0, c2, dtype=jnp.int32)
    pb2 = jax.random.normal(k7, (b2, n2, 4), dtype=jnp.float32)
    lg2 = jax.random.normal(k8, (b2, n2, c2), dtype=jnp.float32)

    rt2, rl2, rm2 = _reference(tb2, tc2, pb2, lg2, alpha=1.0)

    total2, loc2, mined2 = ssd_loss(tb2, tc2, pb2, lg2, alpha=1.0)
    jax.block_until_ready((total2, loc2, mined2))
    assert jnp.allclose(total2, rt2, rtol=1e-4, atol=1e-4), (total2, rt2)
    assert jnp.allclose(loc2, rl2, rtol=1e-4, atol=1e-4), (loc2, rl2)
    assert jnp.allclose(mined2, rm2, rtol=1e-4, atol=1e-4), (mined2, rm2)

    # --- multi-tile grid + non-divisible boundary-block path (tile_m=512) ---
    total3, loc3, mined3 = ssd_loss(tb2, tc2, pb2, lg2, alpha=1.0, tile_m=512)
    jax.block_until_ready((total3, loc3, mined3))
    assert jnp.allclose(total3, rt2, rtol=1e-4, atol=1e-4), (total3, rt2)
    assert jnp.allclose(loc3, rl2, rtol=1e-4, atol=1e-4), (loc3, rl2)
    assert jnp.allclose(mined3, rm2, rtol=1e-4, atol=1e-4), (mined3, rm2)

    print("KERNEL_OK")
</pallas_src>

<mosaic_0001>
module attributes {stable_mosaic.version = 11 : i64} {
  func.func @_ssd_loss_kernel(%arg0: i32, %arg1: memref<4x16xf32, #tpu.memory_space<vmem>>, %arg2: memref<4x16xf32, #tpu.memory_space<vmem>>, %arg3: memref<1x16xi32, #tpu.memory_space<vmem>>, %arg4: memref<16x1xi32, #tpu.memory_space<vmem>>, %arg5: memref<16x8xf32, #tpu.memory_space<vmem>>, %arg6: memref<16x1xf32, #tpu.memory_space<vmem>>, %arg7: memref<1x8x128xf32, #tpu.memory_space<vmem>>) attributes {dimension_semantics = [#tpu.dimension_semantics<parallel>], iteration_bounds = array<i64: 1>, scalar_prefetch = 0 : i64, scratch_operands = 0 : i64, tpu.core_type = #tpu.core_type<tc>, window_params = [{transform_indices = @transform_0, window_bounds = array<i64: 4, 16>}, {transform_indices = @transform_1, window_bounds = array<i64: 4, 16>}, {transform_indices = @transform_2, window_bounds = array<i64: 1, 16>}, {transform_indices = @transform_3, window_bounds = array<i64: 16, 1>}, {transform_indices = @transform_4, window_bounds = array<i64: 16, 8>}, {transform_indices = @transform_5, window_bounds = array<i64: 16, 1>}, {transform_indices = @transform_6, window_bounds = array<i64: 1, 8, 128>}]} {
    %c0 = arith.constant 0 : index
    %c0_0 = arith.constant 0 : index
    %0 = vector.load %arg3[%c0, %c0_0] : memref<1x16xi32, #tpu.memory_space<vmem>>, vector<1x16xi32>
    %1 = tpu.iota {dimensions = array<i32: 1>} : vector<1x16xi32>
    %c16_i32 = arith.constant 16 : i32
    %2 = arith.muli %arg0, %c16_i32 : i32
    %3 = vector.broadcast %2 : i32 to vector<1x16xi32>
    %4 = arith.addi %3, %1 : vector<1x16xi32>
    %c16_i32_1 = arith.constant 16 : i32
    %5 = vector.broadcast %c16_i32_1 : i32 to vector<1x16xi32>
    %6 = arith.cmpi slt, %4, %5 : vector<1x16xi32>
    %c0_i32 = arith.constant 0 : i32
    %7 = vector.broadcast %c0_i32 : i32 to vector<1x16xi32>
    %8 = arith.cmpi sgt, %0, %7 : vector<1x16xi32>
    %9 = arith.andi %8, %6 : vector<1x16xi1>
    %c0_2 = arith.constant 0 : index
    %c0_3 = arith.constant 0 : index
    %10 = vector.load %arg2[%c0_2, %c0_3] : memref<4x16xf32, #tpu.memory_space<vmem>>, vector<4x16xf32>
    %c0_4 = arith.constant 0 : index
    %c0_5 = arith.constant 0 : index
    %11 = vector.load %arg1[%c0_4, %c0_5] : memref<4x16xf32, #tpu.memory_space<vmem>>, vector<4x16xf32>
    %12 = arith.subf %10, %11 : vector<4x16xf32>
    %13 = math.absf %12 : vector<4x16xf32>
    %cst = arith.constant 1.000000e+00 : f32
    %14 = vector.broadcast %cst : f32 to vector<4x16xf32>
    %15 = arith.cmpf olt, %13, %14 : vector<4x16xf32>
    %cst_6 = arith.constant 5.000000e-01 : f32
    %16 = vector.broadcast %cst_6 : f32 to vector<4x16xf32>
    %17 = arith.mulf %16, %12 : vector<4x16xf32>
    %18 = arith.mulf %17, %12 : vector<4x16xf32>
    %cst_7 = arith.constant 5.000000e-01 : f32
    %19 = vector.broadcast %cst_7 : f32 to vector<4x16xf32>
    %20 = arith.subf %13, %19 : vector<4x16xf32>
    %21 = arith.select %15, %18, %20 : vector<4x16xi1>, vector<4x16xf32>
    %cst_8 = arith.constant dense<0.000000e+00> : vector<16xf32>
    %22 = vector.multi_reduction <add>, %21, %cst_8 [0] : vector<4x16xf32> to vector<16xf32>
    %23 = vector.shape_cast %22 : vector<16xf32> to vector<1x16xf32>
    %cst_9 = arith.constant 0.000000e+00 : f32
    %24 = vector.broadcast %cst_9 : f32 to vector<1x16xf32>
    %25 = arith.select %9, %23, %24 : vector<1x16xi1>, vector<1x16xf32>
    %26 = vector.shape_cast %25 : vector<1x16xf32> to vector<1x1x16xf32>
    %cst_10 = arith.constant dense<0.000000e+00> : vector<1xf32>
    %27 = vector.multi_reduction <add>, %26, %cst_10 [1, 2] : vector<1x1x16xf32> to vector<1xf32>
    %28 = vector.shape_cast %27 : vector<1xf32> to vector<1x1x1xf32>
    %29 = vector.extract %28[0, 0, 0] : f32 from vector<1x1x1xf32>
    %cst_11 = arith.constant 1.000000e+00 : f32
    %cst_12 = arith.constant 0.000000e+00 : f32
    %30 = vector.broadcast %cst_11 : f32 to vector<1x16xf32>
    %31 = vector.broadcast %cst_12 : f32 to vector<1x16xf32>
    %32 = arith.select %9, %30, %31 : vector<1x16xi1>, vector<1x16xf32>
    %33 = vector.shape_cast %32 : vector<1x16xf32> to vector<1x1x16xf32>
    %cst_13 = arith.constant dense<0.000000e+00> : vector<1xf32>
    %34 = vector.multi_reduction <add>, %33, %cst_13 [1, 2] : vector<1x1x16xf32> to vector<1xf32>
    %35 = vector.shape_cast %34 : vector<1xf32> to vector<1x1x1xf32>
    %36 = vector.extract %35[0, 0, 0] : f32 from vector<1x1x1xf32>
    %c0_14 = arith.constant 0 : index
    %c0_15 = arith.constant 0 : index
    %37 = vector.load %arg4[%c0_14, %c0_15] : memref<16x1xi32, #tpu.memory_space<vmem>>, vector<16x1xi32>
    %38 = tpu.iota {dimensions = array<i32: 0>} : vector<16x1xi32>
    %c16_i32_16 = arith.constant 16 : i32
    %39 = arith.muli %arg0, %c16_i32_16 : i32
    %40 = vector.broadcast %39 : i32 to vector<16x1xi32>
    %41 = arith.addi %40, %38 : vector<16x1xi32>
    %c16_i32_17 = arith.constant 16 : i32
    %42 = vector.broadcast %c16_i32_17 : i32 to vector<16x1xi32>
    %43 = arith.cmpi slt, %41, %42 : vector<16x1xi32>
    %c0_i32_18 = arith.constant 0 : i32
    %44 = vector.broadcast %c0_i32_18 : i32 to vector<16x1xi32>
    %45 = arith.cmpi sgt, %37, %44 : vector<16x1xi32>
    %46 = arith.andi %45, %43 : vector<16x1xi1>
    %c0_19 = arith.constant 0 : index
    %c0_20 = arith.constant 0 : index
    %47 = vector.load %arg5[%c0_19, %c0_20] : memref<16x8xf32, #tpu.memory_space<vmem>>, vector<16x8xf32>
    %cst_21 = arith.constant 0.000000e+00 : f32
    %48 = vector.shape_cast %43 : vector<16x1xi1> to vector<16x1xi1>
    %49 = vector.broadcast %48 : vector<16x1xi1> to vector<16x8xi1>
    %50 = vector.broadcast %cst_21 : f32 to vector<16x8xf32>
    %51 = arith.select %49, %47, %50 : vector<16x8xi1>, vector<16x8xf32>
    %cst_22 = arith.constant dense<0xFF800000> : vector<16xf32>
    %52 = vector.multi_reduction <maximumf>, %51, %cst_22 [1] : vector<16x8xf32> to vector<16xf32>
    %53 = vector.shape_cast %52 : vector<16xf32> to vector<16x1xf32>
    %54 = vector.broadcast %53 : vector<16x1xf32> to vector<16x8xf32>
    %55 = arith.subf %51, %54 : vector<16x8xf32>
    %56 = math.exp %55 : vector<16x8xf32>
    %cst_23 = arith.constant dense<0.000000e+00> : vector<16xf32>
    %57 = vector.multi_reduction <add>, %56, %cst_23 [1] : vector<16x8xf32> to vector<16xf32>
    %58 = vector.shape_cast %57 : vector<16xf32> to vector<16x1xf32>
    %59 = math.log %58 : vector<16x1xf32>
    %60 = arith.addf %53, %59 : vector<16x1xf32>
    %61 = tpu.iota {dimensions = array<i32: 1>} : vector<16x8xi32>
    %62 = vector.broadcast %37 : vector<16x1xi32> to vector<16x8xi32>
    %63 = arith.cmpi eq, %61, %62 : vector<16x8xi32>
    %cst_24 = arith.constant 0.000000e+00 : f32
    %64 = vector.broadcast %cst_24 : f32 to vector<16x8xf32>
    %65 = arith.select %63, %51, %64 : vector<16x8xi1>, vector<16x8xf32>
    %cst_25 = arith.constant dense<0.000000e+00> : vector<16xf32>
    %66 = vector.multi_reduction <add>, %65, %cst_25 [1] : vector<16x8xf32> to vector<16xf32>
    %67 = vector.shape_cast %66 : vector<16xf32> to vector<16x1xf32>
    %68 = arith.subf %60, %67 : vector<16x1xf32>
    %cst_26 = arith.constant 0.000000e+00 : f32
    %69 = vector.broadcast %cst_26 : f32 to vector<16x1xf32>
    %70 = arith.select %46, %68, %69 : vector<16x1xi1>, vector<16x1xf32>
    %71 = vector.shape_cast %70 : vector<16x1xf32> to vector<1x16x1xf32>
    %cst_27 = arith.constant dense<0.000000e+00> : vector<1xf32>
    %72 = vector.multi_reduction <add>, %71, %cst_27 [1, 2] : vector<1x16x1xf32> to vector<1xf32>
    %73 = vector.shape_cast %72 : vector<1xf32> to vector<1x1x1xf32>
    %74 = vector.extract %73[0, 0, 0] : f32 from vector<1x1x1xf32>
    %cst_28 = arith.constant 0xFF800000 : f32
    %75 = vector.broadcast %cst_28 : f32 to vector<16x1xf32>
    %76 = arith.select %46, %75, %68 : vector<16x1xi1>, vector<16x1xf32>
    %c0_29 = arith.constant 0 : index
    %c0_30 = arith.constant 0 : index
    %77 = vector.load %arg6[%c0_29, %c0_30] : memref<16x1xf32, #tpu.memory_space<vmem>>, vector<16x1xf32>
    tpu.vector_store %arg6[%c0_29, %c0_30], %76 {strides = array<i32>} : memref<16x1xf32, #tpu.memory_space<vmem>>, vector<16x1xf32>,
    %78 = tpu.iota {dimensions = array<i32: 2>} : vector<1x8x128xi32>
    %c0_i32_31 = arith.constant 0 : i32
    %79 = vector.broadcast %c0_i32_31 : i32 to vector<1x8x128xi32>
    %80 = arith.cmpi eq, %78, %79 : vector<1x8x128xi32>
    %c1_i32 = arith.constant 1 : i32
    %81 = vector.broadcast %c1_i32 : i32 to vector<1x8x128xi32>
    %82 = arith.cmpi eq, %78, %81 : vector<1x8x128xi32>
    %c2_i32 = arith.constant 2 : i32
    %83 = vector.broadcast %c2_i32 : i32 to vector<1x8x128xi32>
    %84 = arith.cmpi eq, %78, %83 : vector<1x8x128xi32>
    %cst_32 = arith.constant 0.000000e+00 : f32
    %85 = vector.broadcast %36 : f32 to vector<1x8x128xf32>
    %86 = vector.broadcast %cst_32 : f32 to vector<1x8x128xf32>
    %87 = arith.select %84, %85, %86 : vector<1x8x128xi1>, vector<1x8x128xf32>
    %88 = vector.broadcast %74 : f32 to vector<1x8x128xf32>
    %89 = arith.select %82, %88, %87 : vector<1x8x128xi1>, vector<1x8x128xf32>
    %90 = vector.broadcast %29 : f32 to vector<1x8x128xf32>
    %91 = arith.select %80, %90, %89 : vector<1x8x128xi1>, vector<1x8x128xf32>
    %c0_33 = arith.constant 0 : index
    %c0_34 = arith.constant 0 : index
    %c0_35 = arith.constant 0 : index
    %92 = vector.load %arg7[%c0_33, %c0_34, %c0_35] : memref<1x8x128xf32, #tpu.memory_space<vmem>>, vector<1x8x128xf32>
    tpu.vector_store %arg7[%c0_33, %c0_34, %c0_35], %91 {strides = array<i32>} : memref<1x8x128xf32, #tpu.memory_space<vmem>>, vector<1x8x128xf32>,
    return
  }
  func.func @transform_0(%arg0: i32) -> (i32, i32) {
    %c0_i32 = arith.constant 0 : i32
    %c0_i32_0 = arith.constant 0 : i32
    return %c0_i32, %arg0 : i32, i32
  }
  func.func @transform_1(%arg0: i32) -> (i32, i32) {
    %c0_i32 = arith.constant 0 : i32
    %c0_i32_0 = arith.constant 0 : i32
    return %c0_i32, %arg0 : i32, i32
  }
  func.func @transform_2(%arg0: i32) -> (i32, i32) {
    %c0_i32 = arith.constant 0 : i32
    %c0_i32_0 = arith.constant 0 : i32
    return %c0_i32, %arg0 : i32, i32
  }
  func.func @transform_3(%arg0: i32) -> (i32, i32) {
    %c0_i32 = arith.constant 0 : i32
    %c0_i32_0 = arith.constant 0 : i32
    return %arg0, %c0_i32 : i32, i32
  }
  func.func @transform_4(%arg0: i32) -> (i32, i32) {
    %c0_i32 = arith.constant 0 : i32
    %c0_i32_0 = arith.constant 0 : i32
    return %arg0, %c0_i32 : i32, i32
  }
  func.func @transform_5(%arg0: i32) -> (i32, i32) {
    %c0_i32 = arith.constant 0 : i32
    %c0_i32_0 = arith.constant 0 : i32
    return %arg0, %c0_i32 : i32, i32
  }
  func.func @transform_6(%arg0: i32) -> (i32, i32, i32) {
    %c0_i32 = arith.constant 0 : i32
    %c0_i32_0 = arith.constant 0 : i32
    %c0_i32_1 = arith.constant 0 : i32
    return %arg0, %c0_i32, %c0_i32_0 : i32, i32, i32
  }
}

</mosaic_0001>

<llo_original>
// kernel: ssd_loss.1
$region0: #{ssd_loss.1}
  #allocation0 [shape = 'u32[]', space=smem, size = 0x4, offset = 0x4, fixed_abs, tag = 'smem constant byte address 0x4 - core index']
  #allocation1 [shape = 'u32[144,128]{1,0:T(1,128)}', space=vmem, size = 0x12000, scoped, tag = 'internal scratch']
  %s0 = inlined_call_operand.vmem [shape: f32[4,16], index: 0, kind: input, shape index: {}]
  %s1 = inlined_call_operand.vmem [shape: f32[4,16], index: 1, kind: input, shape index: {}]
  %s2 = inlined_call_operand.vmem [shape: s32[1,16], index: 2, kind: input, shape index: {}]
  %s3 = inlined_call_operand.vmem [shape: s32[16,1], index: 3, kind: input, shape index: {}]
  %s4 = inlined_call_operand.vmem [shape: f32[16,8], index: 4, kind: input, shape index: {}]
  %s5 = inlined_call_operand.vmem [shape: f32[16,1], index: 5, kind: output, shape index: {0}]
  %s6 = inlined_call_operand.vmem [shape: f32[1,8,128], index: 6, kind: output, shape index: {1}]
  %7 = xla_tuple %s5, %s6
  %s8 = sld [smem:[#allocation0]]
  $region38: #{ssd_loss.1} parent=0
    _
  %s10 = ssub.s32 1, %s8
  %s11 = scalar_select 0, %s10, %s8
  // Predicated region
  $region2: #{ssd_loss.1} parent=0 // pred_check
    _
  $region3: #{ssd_loss.1} parent=0 // pred_check_branch
    %13 = sbr.rel (0) target = $region5
  $region4: #{ssd_loss.1} parent=0 // pred_region
    _
  $region5: #{ssd_loss.1} parent=0 // pred_fallthru
    _
  // Predicated region
  $region6: #{ssd_loss.1} parent=0 // pred_check
    _
  $region7: #{ssd_loss.1} parent=0 // pred_check_branch
    %15 = sbr.rel (0) target = $region9
  $region8: #{ssd_loss.1} parent=0 // pred_region
    _
  $region9: #{ssd_loss.1} parent=0 // pred_fallthru
    _
  // Predicated region
  $region10: #{ssd_loss.1} parent=0 // pred_check
    _
  $region11: #{ssd_loss.1} parent=0 // pred_check_branch
    %17 = sbr.rel (0) target = $region13
  $region12: #{ssd_loss.1} parent=0 // pred_region
    _
  $region13: #{ssd_loss.1} parent=0 // pred_fallthru
    _
  // Predicated region
  $region14: #{ssd_loss.1} parent=0 // pred_check
    _
  $region15: #{ssd_loss.1} parent=0 // pred_check_branch
    %19 = sbr.rel (0) target = $region17
  $region16: #{ssd_loss.1} parent=0 // pred_region
    _
  $region17: #{ssd_loss.1} parent=0 // pred_fallthru
    _
  // Predicated region
  $region18: #{ssd_loss.1} parent=0 // pred_check
    _
  $region19: #{ssd_loss.1} parent=0 // pred_check_branch
    %21 = sbr.rel (0) target = $region21
  $region20: #{ssd_loss.1} parent=0 // pred_region
    _
  $region21: #{ssd_loss.1} parent=0 // pred_fallthru
    _
  %v22 = vld [vmem:[%s2] sm:$0x1]
  %v23 = vlaneseq
  %v24 = vand.u32 %v23, 127
  %s25 = smul.u32 0, 16
  %v26 = vstv %s25
  %v27 = vadd.s32 %v26, %v24
  %vm28 = vcmp.lt.s32.totalorder %v27, 16
  %vm29 = vcmp.gt.s32.totalorder %v22, 0
  %vm30 = vmand %vm29, %vm28
  %v31 = vld [vmem:[%s1] sm:$0xf]
  %v32 = vld [vmem:[%s0] sm:$0xf]
  %v33 = vsub.f32 %v31, %v32
  %v34 = vand.u32 2147483647, %v33
  %vm35 = vcmp.lt.f32.partialorder %v34, 1.0
  %v36 = vmul.f32 %v33, 0.5
  %v37 = vmul.f32 %v36, %v33
  %v38 = vsub.f32 %v34, 0.5
  %v39 = vsel %vm35, %v37, %v38
  %vm40 = vcmask 125952
  %v41 = vsel %vm40, %v39, 0.0
  %v42 = vrot.slane %v41, 4
  %v43 = vadd.f32 %v41, %v42
  %v44 = vrot.slane %v43, 2
  %v45 = vadd.f32 %v43, %v44
  %v46 = vrot.slane %v45, 1
  %v47 = vadd.f32 %v45, %v46
  %v48 = vsel %vm30, %v47, 0.0
  %vm49 = vcmask 122880
  %v50 = vsel %vm49, %v48, 0.0
  %51 = vadd.xlane.f32.xlu0 %v50
  %v52 = vpop.xlane.xlu0 %51
  %v53 = vrot.slane %v52, 4
  %v54 = vadd.f32 %v52, %v53
  %v55 = vrot.slane %v54, 2
  %v56 = vadd.f32 %v54, %v55
  %v57 = vrot.slane %v56, 1
  %v58 = vadd.f32 %v56, %v57
  %s59 = vtos %v58
  %v60 = vsel %vm30, 1.0, 0.0
  %v61 = vsel %vm49, %v60, 0.0
  %62 = vadd.xlane.f32.xlu0 %v61
  %v63 = vpop.xlane.xlu0 %62
  %v64 = vrot.slane %v63, 4
  %v65 = vadd.f32 %v63, %v64
  %v66 = vrot.slane %v65, 2
  %v67 = vadd.f32 %v65, %v66
  %v68 = vrot.slane %v67, 1
  %v69 = vadd.f32 %v67, %v68
  %s70 = vtos %v69
  %v71 = vld [vmem:[%s3] sm:$0xff]
  %v72 = vld [vmem:[%s3 + $0x8] sm:$0xff]
  %v73 = vlaneseq
  %v74 = vshrl.u32 %v73, 7
  %v75 = vadd.s32 %v74, 8
  %v76 = vadd.s32 %v26, %v74
  %v77 = vadd.s32 %v26, %v75
  %vm78 = vcmp.lt.s32.totalorder %v76, 16
  %vm79 = vcmp.lt.s32.totalorder %v77, 16
  %vm80 = vcmp.gt.s32.totalorder %v71, 0
  %vm81 = vcmp.gt.s32.totalorder %v72, 0
  %vm82 = vmand %vm80, %vm78
  %vm83 = vmand %vm81, %vm79
  %v84 = vld [vmem:[%s4] sm:$0xff]
  %v85 = vld [vmem:[%s4 + $0x8] sm:$0xff]
  %v86 = vsel %vm78, 1, 0
  %v87 = vsel %vm79, 1, 0
  %vm88 = vcmp.eq.s32.totalorder %v86, 1
  %vm89 = vcmp.eq.s32.totalorder %v87, 1
  %v90 = vsel %vm88, %v84, 0.0
  %v91 = vsel %vm89, %v85, 0.0
  %vm92 = vcmask 64512
  %v93 = vsel %vm92, %v90, -inf
  %94 = vmax.xlane.f32.xlu0 %v93
  %v95 = vpop.xlane.xlu0 %94
  %v96 = vsel %vm92, %v91, -inf
  %97 = vmax.xlane.f32.xlu0 %v96
  %v98 = vpop.xlane.xlu0 %97
  %v99 = vsub.f32 %v90, %v95
  %v100 = vsub.f32 %v91, %v98
  %v101 = vmul.f32 %v99, 1.442695
  %v102 = vpow.pop %v101
  %v103 = vmul.f32 %v100, 1.442695
  %v104 = vpow.pop %v103
  %v105 = vsel %vm92, %v102, 0.0
  %106 = vadd.xlane.f32.xlu0 %v105
  %v107 = vpop.xlane.xlu0 %106
  %v108 = vsel %vm92, %v104, 0.0
  %109 = vadd.xlane.f32.xlu0 %v108
  %v110 = vpop.xlane.xlu0 %109
  %v111 = vlog2.pop %v107
  %v112 = vmul.f32 %v111, 0.6931472
  %v113 = vlog2.pop %v110
  %v114 = vmul.f32 %v113, 0.6931472
  %v115 = vadd.f32 %v95, %v112
  %v116 = vadd.f32 %v98, %v114
  %117 = vset.pattern.permute.xlu0 0
  %118 = vperm.xlu0 %117, %v71
  %v119 = vpop.permute.xlu0 %118
  %120 = vset.pattern.permute.xlu0 0
  %121 = vperm.xlu0 %120, %v72
  %v122 = vpop.permute.xlu0 %121
  %vm123 = vcmp.eq.s32.totalorder %v24, %v119
  %vm124 = vcmp.eq.s32.totalorder %v24, %v122
  %v125 = vsel %vm123, %v90, 0.0
  %v126 = vsel %vm124, %v91, 0.0
  %v127 = vsel %vm92, %v125, 0.0
  %128 = vadd.xlane.f32.xlu0 %v127
  %v129 = vpop.xlane.xlu0 %128
  %v130 = vsel %vm92, %v126, 0.0
  %131 = vadd.xlane.f32.xlu0 %v130
  %v132 = vpop.xlane.xlu0 %131
  %v133 = vsub.f32 %v115, %v129
  %v134 = vsub.f32 %v116, %v132
  %v135 = vsel %vm82, %v133, 0.0
  %v136 = vsel %vm83, %v134, 0.0
  %vm137 = vcmask 7168
  %v138 = vsel %vm137, %v135, 0.0
  %v139 = vsel %vm137, %v136, 0.0
  %v140 = vadd.f32 %v138, %v139
  %141 = vadd.xlane.f32.xlu0 %v140
  %v142 = vpop.xlane.xlu0 %141
  %v143 = vrot.slane %v142, 4
  %v144 = vadd.f32 %v142, %v143
  %v145 = vrot.slane %v144, 2
  %v146 = vadd.f32 %v144, %v145
  %v147 = vrot.slane %v146, 1
  %v148 = vadd.f32 %v146, %v147
  %s149 = vtos %v148
  %v150 = vsel %vm82, -inf, %v133
  %v151 = vsel %vm83, -inf, %v134
  %152 = vst.msk [vmem:[%s5] sm:$0xff] %vm137, %v150
  %153 = vst.msk [vmem:[%s5 + $0x8] sm:$0xff] %vm137, %v151
  %vm154 = vcmp.eq.s32.totalorder %v24, 0
  %vm155 = vcmp.eq.s32.totalorder %v24, 1
  %vm156 = vcmp.eq.s32.totalorder %v24, 2
  %v157 = vstv %s70
  %v158 = vsel %vm156, %v157, 0.0
  %v159 = vstv %s149
  %v160 = vsel %vm155, %v159, %v158
  %v161 = vstv %s59
  %v162 = vsel %vm154, %v161, %v160
  %163 = vst [vmem:[%s6] sm:$0xff] %v162
  // Predicated region
  $region22: #{ssd_loss.1} parent=0 // pred_check
    _
  $region23: #{ssd_loss.1} parent=0 // pred_check_branch
    %165 = sbr.rel (0) target = $region25
  $region24: #{ssd_loss.1} parent=0 // pred_region
    _
  $region25: #{ssd_loss.1} parent=0 // pred_fallthru
    _
  // Predicated region
  $region26: #{ssd_loss.1} parent=0 // pred_check
    _
  $region27: #{ssd_loss.1} parent=0 // pred_check_branch
    %167 = sbr.rel (0) target = $region29
  $region28: #{ssd_loss.1} parent=0 // pred_region
    _
  $region29: #{ssd_loss.1} parent=0 // pred_fallthru
    _
  // Predicated region
  $region30: #{ssd_loss.1} parent=0 // pred_check
    _
  $region31: #{ssd_loss.1} parent=0 // pred_check_branch
    %169 = sbr.rel (0) target = $region33
  $region32: #{ssd_loss.1} parent=0 // pred_region
    _
  $region33: #{ssd_loss.1} parent=0 // pred_fallthru
    _
  // Predicated region
  $region34: #{ssd_loss.1} parent=0 // pred_check
    _
  $region35: #{ssd_loss.1} parent=0 // pred_check_branch
    %171 = sbr.rel (0) target = $region37
  $region36: #{ssd_loss.1} parent=0 // pred_region
    _
  $region37: #{ssd_loss.1} parent=0 // pred_fallthru
    _

</llo_original>
